<compile_context>
chip_gen: v6e
topology: v6e:2x2x1
jax: 0.10.0
libtpu: 0.0.40
codegen_flags: <defaults>
</compile_context>

<pallas_src>
import functools

import jax
import jax.numpy as jnp
from jax import lax
from jax.experimental import pallas as pl
from jax.experimental.pallas import tpu as pltpu

SMOOTH = 1e-06


def _bce_dice_kernel(x_ref, t_ref, inter_ref, union_ref, bce_ref,
                     inter_acc, union_acc, bce_acc,
                     *, hw, tn, mask_hw, binary_targets):
    # x_ref, t_ref: (TM, TN) tiles (native dtype); outputs/scratch: (TM, 1) f32
    j = pl.program_id(1)

    @pl.when(j == 0)
    def _init():
        inter_acc[...] = jnp.zeros_like(inter_acc)
        union_acc[...] = jnp.zeros_like(union_acc)
        bce_acc[...] = jnp.zeros_like(bce_acc)

    x = x_ref[...].astype(jnp.float32)
    t = t_ref[...].astype(jnp.float32)

    if mask_hw:
        # Ragged last HW tile: zero the out-of-range lanes so every term
        # (x*t, x+t, BCE with clamped logs) contributes exactly 0. Cheap VALU
        # work, fully hidden under the HBM stream.
        col = lax.broadcasted_iota(jnp.int32, (1, tn), 1) + j * tn
        valid = col < hw
        x = jnp.where(valid, x, 0.0)
        t = jnp.where(valid, t, 0.0)

    # Dice partials: raw per-row sums (smoothing / mean deferred to wrapper).
    inter_acc[...] += jnp.sum(x * t, axis=1, keepdims=True)
    union_acc[...] += jnp.sum(x + t, axis=1, keepdims=True)

    # BCE partial: raw per-row sum of the log-likelihood terms.
    if binary_targets:
        # Single EUP log per element (valid only for hard {0,1} targets).
        p = jnp.where(t > 0.5, x, 1.0 - x)
        bce_term = jnp.maximum(jnp.log(p), -100.0)
    else:
        # Exact PyTorch BCELoss semantics (soft targets OK); logs clamped at
        # -100 before the multiply so x=0 / x=1 never produce NaN.
        log_p = jnp.maximum(jnp.log(x), -100.0)
        log_1mp = jnp.maximum(jnp.log(1.0 - x), -100.0)
        bce_term = t * log_p + (1.0 - t) * log_1mp
    bce_acc[...] += jnp.sum(bce_term, axis=1, keepdims=True)

    # Write the tiny per-row partials only on the last reduction step.
    @pl.when(j == pl.num_programs(1) - 1)
    def _finalize():
        inter_ref[...] = inter_acc[...]
        union_ref[...] = union_acc[...]
        bce_ref[...] = bce_acc[...]


def _round_up(x, m):
    return ((x + m - 1) // m) * m


def _sublane_multiple(dtype):
    # f32 -> 8 sublanes, bf16 -> 16, int8/fp8/bool -> 32.
    return max(8, 32 // jnp.dtype(dtype).itemsize)


def bce_dice(inputs, targets, *, binary_targets=False,
             tm_target=256, tn_target=2048):
    """inputs, targets: (N, C, H, W). Returns scalar f32 loss."""
    N, C, H, W = inputs.shape
    NC, HW = N * C, H * W

    # Stream native dtype; cast to f32 per tile inside the kernel.
    x2 = inputs.reshape(NC, HW)
    t2 = targets.reshape(NC, HW)

    sub = max(_sublane_multiple(x2.dtype), _sublane_multiple(t2.dtype))
    tm = min(tm_target, _round_up(NC, sub))
    tn = min(tn_target, _round_up(HW, 128))
    grid = (pl.cdiv(NC, tm), pl.cdiv(HW, tn))
    mask_hw = (HW % tn) != 0   # only then does the last HW tile hold garbage

    kernel = functools.partial(
        _bce_dice_kernel,
        hw=HW, tn=tn, mask_hw=mask_hw, binary_targets=binary_targets)

    out_sds = jax.ShapeDtypeStruct((NC, 1), jnp.float32)
    row_spec = pl.BlockSpec((tm, 1), lambda i, j: (i, 0))

    inter, union, bce_rows = pl.pallas_call(
        kernel,
        out_shape=(out_sds, out_sds, out_sds),
        grid_spec=pltpu.PrefetchScalarGridSpec(
            num_scalar_prefetch=0,
            grid=grid,
            in_specs=[
                pl.BlockSpec((tm, tn), lambda i, j: (i, j)),
                pl.BlockSpec((tm, tn), lambda i, j: (i, j)),
            ],
            out_specs=[row_spec, row_spec, row_spec],
            scratch_shapes=[
                pltpu.VMEM((tm, 1), jnp.float32),
                pltpu.VMEM((tm, 1), jnp.float32),
                pltpu.VMEM((tm, 1), jnp.float32),
            ],
        ),
        compiler_params=pltpu.CompilerParams(
            dimension_semantics=("parallel", "arbitrary"),
        ),
    )(x2, t2)

    # Final cheap combine on the (NC,) partials.
    inter = inter[:, 0]
    union = union[:, 0]
    dice_score = (2.0 * inter + SMOOTH) / (union + SMOOTH)
    dice_loss = 1.0 - jnp.mean(dice_score)
    bce = -jnp.sum(bce_rows[:, 0]) / (NC * HW)
    return 0.2 * dice_loss + 0.8 * bce


def _reference(inputs, targets):
    x = inputs.astype(jnp.float32)
    t = targets.astype(jnp.float32)
    inter = jnp.sum(x * t, axis=(2, 3))
    union = jnp.sum(x + t, axis=(2, 3))
    dice = 1.0 - jnp.mean((2.0 * inter + SMOOTH) / (union + SMOOTH))
    bce = -jnp.mean(
        t * jnp.maximum(jnp.log(x), -100.0)
        + (1.0 - t) * jnp.maximum(jnp.log(1.0 - x), -100.0)
    )
    return 0.2 * dice + 0.8 * bce


if __name__ == "__main__":
    key = jax.random.PRNGKey(0)
    k1, k2, k3, k4 = jax.random.split(key, 4)

    # Primary shape implied by the module (aligned case, no masking path).
    N, C, H, W = 2, 4, 16, 16
    inputs = jax.nn.sigmoid(jax.random.normal(k1, (N, C, H, W), jnp.float32))
    targets = (jax.random.uniform(k2, (N, C, H, W)) > 0.5).astype(jnp.float32)
    loss = bce_dice(inputs, targets)
    jax.block_until_ready(loss)
    assert jnp.allclose(loss, _reference(inputs, targets), rtol=1e-5, atol=1e-6)

    # Ragged shape: exercises in-kernel edge masking (no wrapper-side padding).
    N2, C2, H2, W2 = 2, 3, 10, 15
    inputs2 = jax.nn.sigmoid(jax.random.normal(k3, (N2, C2, H2, W2), jnp.float32))
    targets2 = (jax.random.uniform(k4, (N2, C2, H2, W2)) > 0.5).astype(jnp.float32)
    loss2 = bce_dice(inputs2, targets2)
    jax.block_until_ready(loss2)
    assert jnp.allclose(loss2, _reference(inputs2, targets2), rtol=1e-5, atol=1e-6)

    print("KERNEL_OK")
</pallas_src>

<mosaic_0001>
module attributes {stable_mosaic.version = 11 : i64} {
  func.func @_bce_dice_kernel(%arg0: i32, %arg1: i32, %arg2: memref<8x256xf32, #tpu.memory_space<vmem>>, %arg3: memref<8x256xf32, #tpu.memory_space<vmem>>, %arg4: memref<8x1xf32, #tpu.memory_space<vmem>>, %arg5: memref<8x1xf32, #tpu.memory_space<vmem>>, %arg6: memref<8x1xf32, #tpu.memory_space<vmem>>, %arg7: memref<8x1xf32, #tpu.memory_space<vmem>>, %arg8: memref<8x1xf32, #tpu.memory_space<vmem>>, %arg9: memref<8x1xf32, #tpu.memory_space<vmem>>) attributes {dimension_semantics = [#tpu.dimension_semantics<parallel>, #tpu.dimension_semantics<arbitrary>], iteration_bounds = array<i64: 1, 1>, scalar_prefetch = 0 : i64, scratch_operands = 3 : i64, tpu.core_type = #tpu.core_type<tc>, window_params = [{transform_indices = @transform_0, window_bounds = array<i64: 8, 256>}, {transform_indices = @transform_1, window_bounds = array<i64: 8, 256>}, {transform_indices = @transform_2, window_bounds = array<i64: 8, 1>}, {transform_indices = @transform_3, window_bounds = array<i64: 8, 1>}, {transform_indices = @transform_4, window_bounds = array<i64: 8, 1>}]} {
    %c0_i32 = arith.constant 0 : i32
    %0 = arith.cmpi eq, %arg1, %c0_i32 : i32
    %1 = arith.extui %0 : i1 to i32
    %c0_i32_0 = arith.constant 0 : i32
    %2 = arith.cmpi ne, %1, %c0_i32_0 : i32
    scf.if %2 {
      %cst_24 = arith.constant 0.000000e+00 : f32
      %38 = vector.broadcast %cst_24 : f32 to vector<8x1xf32>
      %c0_25 = arith.constant 0 : index
      %c0_26 = arith.constant 0 : index
      %39 = vector.load %arg7[%c0_25, %c0_26] : memref<8x1xf32, #tpu.memory_space<vmem>>, vector<8x1xf32>
      tpu.vector_store %arg7[%c0_25, %c0_26], %38 {strides = array<i32>} : memref<8x1xf32, #tpu.memory_space<vmem>>, vector<8x1xf32>,
      %cst_27 = arith.constant 0.000000e+00 : f32
      %40 = vector.broadcast %cst_27 : f32 to vector<8x1xf32>
      %c0_28 = arith.constant 0 : index
      %c0_29 = arith.constant 0 : index
      %41 = vector.load %arg8[%c0_28, %c0_29] : memref<8x1xf32, #tpu.memory_space<vmem>>, vector<8x1xf32>
      tpu.vector_store %arg8[%c0_28, %c0_29], %40 {strides = array<i32>} : memref<8x1xf32, #tpu.memory_space<vmem>>, vector<8x1xf32>,
      %cst_30 = arith.constant 0.000000e+00 : f32
      %42 = vector.broadcast %cst_30 : f32 to vector<8x1xf32>
      %c0_31 = arith.constant 0 : index
      %c0_32 = arith.constant 0 : index
      %43 = vector.load %arg9[%c0_31, %c0_32] : memref<8x1xf32, #tpu.memory_space<vmem>>, vector<8x1xf32>
      tpu.vector_store %arg9[%c0_31, %c0_32], %42 {strides = array<i32>} : memref<8x1xf32, #tpu.memory_space<vmem>>, vector<8x1xf32>,
    } else {
    }
    %c0 = arith.constant 0 : index
    %c0_1 = arith.constant 0 : index
    %3 = vector.load %arg2[%c0, %c0_1] : memref<8x256xf32, #tpu.memory_space<vmem>>, vector<8x256xf32>
    %c0_2 = arith.constant 0 : index
    %c0_3 = arith.constant 0 : index
    %4 = vector.load %arg3[%c0_2, %c0_3] : memref<8x256xf32, #tpu.memory_space<vmem>>, vector<8x256xf32>
    %c0_4 = arith.constant 0 : index
    %c0_5 = arith.constant 0 : index
    %5 = vector.load %arg7[%c0_4, %c0_5] : memref<8x1xf32, #tpu.memory_space<vmem>>, vector<8x1xf32>
    %6 = arith.mulf %3, %4 : vector<8x256xf32>
    %cst = arith.constant dense<0.000000e+00> : vector<8xf32>
    %7 = vector.multi_reduction <add>, %6, %cst [1] : vector<8x256xf32> to vector<8xf32>
    %8 = vector.shape_cast %7 : vector<8xf32> to vector<8x1xf32>
    %9 = arith.addf %5, %8 : vector<8x1xf32>
    %c0_6 = arith.constant 0 : index
    %c0_7 = arith.constant 0 : index
    %10 = vector.load %arg7[%c0_6, %c0_7] : memref<8x1xf32, #tpu.memory_space<vmem>>, vector<8x1xf32>
    tpu.vector_store %arg7[%c0_6, %c0_7], %9 {strides = array<i32>} : memref<8x1xf32, #tpu.memory_space<vmem>>, vector<8x1xf32>,
    %c0_8 = arith.constant 0 : index
    %c0_9 = arith.constant 0 : index
    %11 = vector.load %arg8[%c0_8, %c0_9] : memref<8x1xf32, #tpu.memory_space<vmem>>, vector<8x1xf32>
    %12 = arith.addf %3, %4 : vector<8x256xf32>
    %cst_10 = arith.constant dense<0.000000e+00> : vector<8xf32>
    %13 = vector.multi_reduction <add>, %12, %cst_10 [1] : vector<8x256xf32> to vector<8xf32>
    %14 = vector.shape_cast %13 : vector<8xf32> to vector<8x1xf32>
    %15 = arith.addf %11, %14 : vector<8x1xf32>
    %c0_11 = arith.constant 0 : index
    %c0_12 = arith.constant 0 : index
    %16 = vector.load %arg8[%c0_11, %c0_12] : memref<8x1xf32, #tpu.memory_space<vmem>>, vector<8x1xf32>
    tpu.vector_store %arg8[%c0_11, %c0_12], %15 {strides = array<i32>} : memref<8x1xf32, #tpu.memory_space<vmem>>, vector<8x1xf32>,
    %17 = math.log %3 : vector<8x256xf32>
    %cst_13 = arith.constant -1.000000e+02 : f32
    %18 = vector.broadcast %cst_13 : f32 to vector<8x256xf32>
    %19 = arith.maximumf %17, %18 : vector<8x256xf32>
    %cst_14 = arith.constant 1.000000e+00 : f32
    %20 = vector.broadcast %cst_14 : f32 to vector<8x256xf32>
    %21 = arith.subf %20, %3 : vector<8x256xf32>
    %22 = math.log %21 : vector<8x256xf32>
    %cst_15 = arith.constant -1.000000e+02 : f32
    %23 = vector.broadcast %cst_15 : f32 to vector<8x256xf32>
    %24 = arith.maximumf %22, %23 : vector<8x256xf32>
    %25 = arith.mulf %4, %19 : vector<8x256xf32>
    %cst_16 = arith.constant 1.000000e+00 : f32
    %26 = vector.broadcast %cst_16 : f32 to vector<8x256xf32>
    %27 = arith.subf %26, %4 : vector<8x256xf32>
    %28 = arith.mulf %27, %24 : vector<8x256xf32>
    %29 = arith.addf %25, %28 : vector<8x256xf32>
    %c0_17 = arith.constant 0 : index
    %c0_18 = arith.constant 0 : index
    %30 = vector.load %arg9[%c0_17, %c0_18] : memref<8x1xf32, #tpu.memory_space<vmem>>, vector<8x1xf32>
    %cst_19 = arith.constant dense<0.000000e+00> : vector<8xf32>
    %31 = vector.multi_reduction <add>, %29, %cst_19 [1] : vector<8x256xf32> to vector<8xf32>
    %32 = vector.shape_cast %31 : vector<8xf32> to vector<8x1xf32>
    %33 = arith.addf %30, %32 : vector<8x1xf32>
    %c0_20 = arith.constant 0 : index
    %c0_21 = arith.constant 0 : index
    %34 = vector.load %arg9[%c0_20, %c0_21] : memref<8x1xf32, #tpu.memory_space<vmem>>, vector<8x1xf32>
    tpu.vector_store %arg9[%c0_20, %c0_21], %33 {strides = array<i32>} : memref<8x1xf32, #tpu.memory_space<vmem>>, vector<8x1xf32>,
    %c0_i32_22 = arith.constant 0 : i32
    %35 = arith.cmpi eq, %arg1, %c0_i32_22 : i32
    %36 = arith.extui %35 : i1 to i32
    %c0_i32_23 = arith.constant 0 : i32
    %37 = arith.cmpi ne, %36, %c0_i32_23 : i32
    scf.if %37 {
      %c0_24 = arith.constant 0 : index
      %c0_25 = arith.constant 0 : index
      %38 = vector.load %arg7[%c0_24, %c0_25] : memref<8x1xf32, #tpu.memory_space<vmem>>, vector<8x1xf32>
      %c0_26 = arith.constant 0 : index
      %c0_27 = arith.constant 0 : index
      %39 = vector.load %arg4[%c0_26, %c0_27] : memref<8x1xf32, #tpu.memory_space<vmem>>, vector<8x1xf32>
      tpu.vector_store %arg4[%c0_26, %c0_27], %38 {strides = array<i32>} : memref<8x1xf32, #tpu.memory_space<vmem>>, vector<8x1xf32>,
      %c0_28 = arith.constant 0 : index
      %c0_29 = arith.constant 0 : index
      %40 = vector.load %arg8[%c0_28, %c0_29] : memref<8x1xf32, #tpu.memory_space<vmem>>, vector<8x1xf32>
      %c0_30 = arith.constant 0 : index
      %c0_31 = arith.constant 0 : index
      %41 = vector.load %arg5[%c0_30, %c0_31] : memref<8x1xf32, #tpu.memory_space<vmem>>, vector<8x1xf32>
      tpu.vector_store %arg5[%c0_30, %c0_31], %40 {strides = array<i32>} : memref<8x1xf32, #tpu.memory_space<vmem>>, vector<8x1xf32>,
      %c0_32 = arith.constant 0 : index
      %c0_33 = arith.constant 0 : index
      %42 = vector.load %arg9[%c0_32, %c0_33] : memref<8x1xf32, #tpu.memory_space<vmem>>, vector<8x1xf32>
      %c0_34 = arith.constant 0 : index
      %c0_35 = arith.constant 0 : index
      %43 = vector.load %arg6[%c0_34, %c0_35] : memref<8x1xf32, #tpu.memory_space<vmem>>, vector<8x1xf32>
      tpu.vector_store %arg6[%c0_34, %c0_35], %42 {strides = array<i32>} : memref<8x1xf32, #tpu.memory_space<vmem>>, vector<8x1xf32>,
    } else {
    }
    return
  }
  func.func @transform_0(%arg0: i32, %arg1: i32) -> (i32, i32) {
    %c0_i32 = arith.constant 0 : i32
    return %arg0, %arg1 : i32, i32
  }
  func.func @transform_1(%arg0: i32, %arg1: i32) -> (i32, i32) {
    %c0_i32 = arith.constant 0 : i32
    return %arg0, %arg1 : i32, i32
  }
  func.func @transform_2(%arg0: i32, %arg1: i32) -> (i32, i32) {
    %c0_i32 = arith.constant 0 : i32
    %c0_i32_0 = arith.constant 0 : i32
    return %arg0, %c0_i32 : i32, i32
  }
  func.func @transform_3(%arg0: i32, %arg1: i32) -> (i32, i32) {
    %c0_i32 = arith.constant 0 : i32
    %c0_i32_0 = arith.constant 0 : i32
    return %arg0, %c0_i32 : i32, i32
  }
  func.func @transform_4(%arg0: i32, %arg1: i32) -> (i32, i32) {
    %c0_i32 = arith.constant 0 : i32
    %c0_i32_0 = arith.constant 0 : i32
    return %arg0, %c0_i32 : i32, i32
  }
}

</mosaic_0001>

<llo_original>
// kernel: tpu_custom_call.1
$region0: #{tpu_custom_call.1}
  #allocation0 [shape = 'u32[]', space=smem, size = 0x4, offset = 0x4, fixed_abs, tag = 'smem constant byte address 0x4 - core index']
  #allocation1 [shape = 'u32[144,128]{1,0:T(1,128)}', space=vmem, size = 0x12000, scoped, tag = 'internal scratch']
  #allocation2 [shape = 'f32[8,1]{1,0:T(8,128)}', space=vmem, size = 0x1000, scoped, tag = 'scratch operand']
  #allocation3 [shape = 'f32[8,1]{1,0:T(8,128)}', space=vmem, size = 0x1000, scoped, tag = 'scratch operand']
  #allocation4 [shape = 'f32[8,1]{1,0:T(8,128)}', space=vmem, size = 0x1000, scoped, tag = 'scratch operand']
  %s0 = inlined_call_operand.hbm [shape: f32[8,256], index: 0, kind: input, shape index: {}]
  %s1 = inlined_call_operand.hbm [shape: f32[8,256], index: 1, kind: input, shape index: {}]
  %s2 = inlined_call_operand.vmem [shape: f32[8,1], index: 2, kind: output, shape index: {0}]
  %s3 = inlined_call_operand.vmem [shape: f32[8,1], index: 3, kind: output, shape index: {1}]
  %s4 = inlined_call_operand.vmem [shape: f32[8,1], index: 4, kind: output, shape index: {2}]
  %5 = xla_tuple %s2, %s3, %s4
  %s6 = sld [smem:[#allocation0]]
  $region50: #{tpu_custom_call.1} parent=0
    _
  %s8 = ssub.s32 1, %s6
  %s9 = scalar_select 0, %s8, %s6
  $region1: #{tpu_custom_call.1} parent=0
    #allocation5 [shape = 'u8[8192]{0}', space=vmem, size = 0x2000, scoped, tag = 'input window, operand 0, single buffered']
    #allocation6 [shape = 's32[1]{0}', space=sflag, size = 0x4, scoped, tag = 'scoped memory for tpu_custom_call.1']
    #allocation7 [shape = 'u8[8192]{0}', space=vmem, size = 0x2000, scoped, tag = 'input window, operand 1, single buffered']
    #allocation8 [shape = 's32[1]{0}', space=sflag, size = 0x4, scoped, tag = 'scoped memory for tpu_custom_call.1']
    %10 = vsyncpa [#allocation6], 0
    %11 = vsyncpa [#allocation8], 0
    // Predicated region
    $region2: #{tpu_custom_call.1} parent=1 // pred_check
      _
    $region3: #{tpu_custom_call.1} parent=1 // pred_check_branch
      %13 = sbr.rel (0) target = $region5
    $region4: #{tpu_custom_call.1} parent=1 // pred_region
      %s15 = ssub.s32 256, 256
      %16 = vsyncadd [#allocation6], %s15
      %s18 = sshll.u32 [#allocation5], 4
      %s19 = int_to_ptr.vmem [resolvable:$true] %s18
      %21 = dma.hbm_to_vmem [thread:$0]  %s0, 256, %s19, [#allocation6]
    $region5: #{tpu_custom_call.1} parent=1 // pred_fallthru
      _
    // Predicated region
    $region6: #{tpu_custom_call.1} parent=1 // pred_check
      _
    $region7: #{tpu_custom_call.1} parent=1 // pred_check_branch
      %23 = sbr.rel (0) target = $region9
    $region8: #{tpu_custom_call.1} parent=1 // pred_region
      %s25 = ssub.s32 256, 256
      %26 = vsyncadd [#allocation8], %s25
      %s28 = sshll.u32 [#allocation7], 4
      %s29 = int_to_ptr.vmem [resolvable:$true] %s28
      %31 = dma.hbm_to_vmem [thread:$0]  %s1, 256, %s29, [#allocation8]
    $region9: #{tpu_custom_call.1} parent=1 // pred_fallthru
      _
    // Predicated region
    $region10: #{tpu_custom_call.1} parent=1 // pred_check
      _
    $region11: #{tpu_custom_call.1} parent=1 // pred_check_branch
      %33 = sbr.rel (0) target = $region13
    $region12: #{tpu_custom_call.1} parent=1 // pred_region
      %34 = dma.done [#allocation6], 256
    $region13: #{tpu_custom_call.1} parent=1 // pred_fallthru
      _
    // Predicated region
    $region14: #{tpu_custom_call.1} parent=1 // pred_check
      _
    $region15: #{tpu_custom_call.1} parent=1 // pred_check_branch
      %36 = sbr.rel (0) target = $region17
    $region16: #{tpu_custom_call.1} parent=1 // pred_region
      %37 = dma.done [#allocation8], 256
    $region17: #{tpu_custom_call.1} parent=1 // pred_fallthru
      _
    %p38 = scmp.eq.s32.totalorder 0, 0
    // Predicated region
    $region18: #{tpu_custom_call.1} parent=1 // pred_check
      %p39 = pneg %p38
    $region19: #{tpu_custom_call.1} parent=1 // pred_check_branch
      %41 = sbr.rel (%p39) target = $region21
    $region20: #{tpu_custom_call.1} parent=1 // pred_region
      %vm42 = vcmask 7168
      %43 = vst.msk [vmem:[#allocation2] sm:$0xff] %vm42, 0.0
      %44 = vst.msk [vmem:[#allocation3] sm:$0xff] %vm42, 0.0
      %45 = vst.msk [vmem:[#allocation4] sm:$0xff] %vm42, 0.0
    $region21: #{tpu_custom_call.1} parent=1 // pred_fallthru
      _
    %v46 = vld [vmem:[#allocation5] sm:$0xff]
    %v47 = vld [vmem:[#allocation5 + $0x8] sm:$0xff]
    %v48 = vld [vmem:[#allocation7] sm:$0xff]
    %v49 = vld [vmem:[#allocation7 + $0x8] sm:$0xff]
    %v50 = vld [vmem:[#allocation2] sm:$0xff]
    %v51 = vmul.f32 %v46, %v48
    %v52 = vmul.f32 %v47, %v49
    %v53 = vadd.f32 %v51, %v52
    %54 = vadd.xlane.f32.xlu0 %v53
    %v55 = vpop.xlane.xlu0 %54
    %v56 = vadd.f32 %v50, %v55
    %vm57 = vcmask 7168
    %58 = vst.msk [vmem:[#allocation2] sm:$0xff] %vm57, %v56
    %v59 = vld [vmem:[#allocation3] sm:$0xff]
    %v60 = vadd.f32 %v46, %v48
    %v61 = vadd.f32 %v47, %v49
    %v62 = vadd.f32 %v60, %v61
    %63 = vadd.xlane.f32.xlu0 %v62
    %v64 = vpop.xlane.xlu0 %63
    %v65 = vadd.f32 %v59, %v64
    %66 = vst.msk [vmem:[#allocation3] sm:$0xff] %vm57, %v65
    %v67 = vlog2.pop %v46
    %v68 = vmul.f32 %v67, 0.6931472
    %v69 = vlog2.pop %v47
    %v70 = vmul.f32 %v69, 0.6931472
    %v71 = vmax.f32 %v68, -100.0
    %v72 = vmax.f32 %v70, -100.0
    %v73 = vsub.f32 1.0, %v46
    %v74 = vsub.f32 1.0, %v47
    %v75 = vlog2.pop %v73
    %v76 = vmul.f32 %v75, 0.6931472
    %v77 = vlog2.pop %v74
    %v78 = vmul.f32 %v77, 0.6931472
    %v79 = vmax.f32 %v76, -100.0
    %v80 = vmax.f32 %v78, -100.0
    %v81 = vmul.f32 %v48, %v71
    %v82 = vmul.f32 %v49, %v72
    %v83 = vsub.f32 1.0, %v48
    %v84 = vsub.f32 1.0, %v49
    %v85 = vmul.f32 %v83, %v79
    %v86 = vmul.f32 %v84, %v80
    %v87 = vadd.f32 %v81, %v85
    %v88 = vadd.f32 %v82, %v86
    %v89 = vld [vmem:[#allocation4] sm:$0xff]
    %v90 = vadd.f32 %v87, %v88
    %91 = vadd.xlane.f32.xlu0 %v90
    %v92 = vpop.xlane.xlu0 %91
    %v93 = vadd.f32 %v89, %v92
    %94 = vst.msk [vmem:[#allocation4] sm:$0xff] %vm57, %v93
    // Predicated region
    $region22: #{tpu_custom_call.1} parent=1 // pred_check
      %p95 = pneg %p38
    $region23: #{tpu_custom_call.1} parent=1 // pred_check_branch
      %97 = sbr.rel (%p95) target = $region25
    $region24: #{tpu_custom_call.1} parent=1 // pred_region
      %v98 = vld [vmem:[#allocation2] sm:$0xff]
      %99 = vst.msk [vmem:[%s2] sm:$0xff] %vm57, %v98
      %v100 = vld [vmem:[#allocation3] sm:$0xff]
      %101 = vst.msk [vmem:[%s3] sm:$0xff] %vm57, %v100
      %v102 = vld [vmem:[#allocation4] sm:$0xff]
      %103 = vst.msk [vmem:[%s4] sm:$0xff] %vm57, %v102
    $region25: #{tpu_custom_call.1} parent=1 // pred_fallthru
      _
    // Predicated region
    $region26: #{tpu_custom_call.1} parent=1 // pred_check
      _
    $region27: #{tpu_custom_call.1} parent=1 // pred_check_branch
      %105 = sbr.rel (0) target = $region29
    $region28: #{tpu_custom_call.1} parent=1 // pred_region
      _
    $region29: #{tpu_custom_call.1} parent=1 // pred_fallthru
      _
    // Predicated region
    $region30: #{tpu_custom_call.1} parent=1 // pred_check
      _
    $region31: #{tpu_custom_call.1} parent=1 // pred_check_branch
      %107 = sbr.rel (0) target = $region33
    $region32: #{tpu_custom_call.1} parent=1 // pred_region
      _
    $region33: #{tpu_custom_call.1} parent=1 // pred_fallthru
      _
    // Predicated region
    $region34: #{tpu_custom_call.1} parent=1 // pred_check
      _
    $region35: #{tpu_custom_call.1} parent=1 // pred_check_branch
      %109 = sbr.rel (0) target = $region37
    $region36: #{tpu_custom_call.1} parent=1 // pred_region
      _
    $region37: #{tpu_custom_call.1} parent=1 // pred_fallthru
      _
    // Predicated region
    $region38: #{tpu_custom_call.1} parent=1 // pred_check
      _
    $region39: #{tpu_custom_call.1} parent=1 // pred_check_branch
      %111 = sbr.rel (0) target = $region41
    $region40: #{tpu_custom_call.1} parent=1 // pred_region
      _
    $region41: #{tpu_custom_call.1} parent=1 // pred_fallthru
      _
    // Predicated region
    $region42: #{tpu_custom_call.1} parent=1 // pred_check
      _
    $region43: #{tpu_custom_call.1} parent=1 // pred_check_branch
      %113 = sbr.rel (0) target = $region45
    $region44: #{tpu_custom_call.1} parent=1 // pred_region
      _
    $region45: #{tpu_custom_call.1} parent=1 // pred_fallthru
      _
    // Predicated region
    $region46: #{tpu_custom_call.1} parent=1 // pred_check
      _
    $region47: #{tpu_custom_call.1} parent=1 // pred_check_branch
      %115 = sbr.rel (0) target = $region49
    $region48: #{tpu_custom_call.1} parent=1 // pred_region
      _
    $region49: #{tpu_custom_call.1} parent=1 // pred_fallthru
      _
    %116 = vsyncpa [#allocation6], 1
    %117 = vsyncpa [#allocation8], 1

</llo_original>
